<compile_context>
chip_gen: v7x
topology: tpu7x:2x2x1
jax: 0.10.0
libtpu: 0.0.40
codegen_flags: <defaults>
</compile_context>

<pallas_src>
import functools

import jax
import jax.numpy as jnp
from jax.experimental import pallas as pl
from jax.experimental.pallas import tpu as pltpu


# ----------------------------------------------------------------------------
# hardware / capability helpers
# ----------------------------------------------------------------------------
def _round_up(x, m):
    return ((x + m - 1) // m) * m


def _tpu_info():
    """(generation, VMEM capacity bytes) with conservative fallbacks."""
    gen = 0
    try:
        kind = jax.devices()[0].device_kind.lower()
        for g in (7, 6, 5, 4, 3, 2):
            if f"v{g}" in kind:
                gen = g
                break
    except Exception:
        pass
    vmem = 0
    try:
        vmem = int(pltpu.get_tpu_info().vmem_capacity_bytes)
    except Exception:
        vmem = 0
    if vmem <= 0:
        # v4/v5e/v6e: 128 MiB; v7x (and unknown): conservative 64 MiB
        vmem = (128 << 20) if gen in (4, 5, 6) else (64 << 20)
    return gen, vmem


_BUFFERED_ONE = None


def _buffered_supported():
    """Probe whether BlockSpec(pipeline_mode=pl.Buffered(k)) exists and is
    correct in this JAX build; otherwise fall back to default double-buffering."""
    global _BUFFERED_ONE
    if _BUFFERED_ONE is not None:
        return _BUFFERED_ONE
    try:
        def _copy(x_ref, o_ref):
            o_ref[...] = x_ref[...]
        x = jnp.arange(8 * 128, dtype=jnp.float32).reshape(8, 128)
        y = pl.pallas_call(
            _copy,
            out_shape=jax.ShapeDtypeStruct((8, 128), jnp.float32),
            grid=(2,),
            in_specs=[pl.BlockSpec((8, 128), lambda i: (0, 0),
                                   pipeline_mode=pl.Buffered(1))],
            out_specs=pl.BlockSpec((8, 128), lambda i: (0, 0)),
        )(x)
        _BUFFERED_ONE = bool(jnp.allclose(jax.block_until_ready(y), x))
    except Exception:
        _BUFFERED_ONE = False
    return _BUFFERED_ONE


def _pick_tile(n, vmem_cap):
    """Destination-row tile: multiple of 32 (int8 adjacency sublane packing),
    generation-aware adjacency-slab budget (bigger on 128-MiB chips), and
    >= 2 grid steps so the ("parallel",) axis can use both v7x TensorCores."""
    big = vmem_cap >= (96 << 20)               # v5e / v6e: 128 MiB VMEM
    budget = (24 << 20) if big else (8 << 20)  # per adjacency slab
    cap = 512 if big else 256
    by_budget = max(32, (budget // max(n, 1)) // 32 * 32)
    half = max(32, _round_up(pl.cdiv(n, 2), 32))
    return max(32, min(cap, by_budget, half))


def _vmem_limit(nbytes, vmem_cap):
    lo = 16 << 20
    hi = max(lo, int(vmem_cap * 0.8))
    return int(max(lo, min(hi, int(nbytes * 1.5) + (2 << 20))))


def _const_spec(block_shape, buffered_ok):
    """Grid-invariant BlockSpec; single-buffered when the build supports it."""
    idx = lambda i: (0,) * len(block_shape)
    if buffered_ok:
        return pl.BlockSpec(block_shape, idx, pipeline_mode=pl.Buffered(1))
    return pl.BlockSpec(block_shape, idx)


# ----------------------------------------------------------------------------
# Kernel 1: fused projection  H_aug = BN(x) @ W_aug   (tiled over node rows)
# ----------------------------------------------------------------------------
_BN_INV_STD = (1.0 + 1e-5) ** -0.5


def _proj_kernel(*refs, batch_normal):
    if batch_normal:
        x_ref, bn_g_ref, bn_b_ref, w_ref, h_ref = refs
    else:
        x_ref, w_ref, h_ref = refs
    x = x_ref[...].astype(jnp.float32)
    if batch_normal:
        # eval-mode BatchNorm1d with running_mean=0, running_var=1, eps=1e-5
        # TODO(synk): plumb real BN running stats if the PyTorch BN was trained.
        x = x * (bn_g_ref[...] * _BN_INV_STD) + bn_b_ref[...]
    acc = jnp.dot(x.astype(jnp.bfloat16), w_ref[...],
                  preferred_element_type=jnp.float32)
    # bf16 store halves the inter-kernel HBM traffic and the resident VMEM slab
    h_ref[...] = acc.astype(h_ref.dtype)


# ----------------------------------------------------------------------------
# Kernel 2: attention softmax + aggregation, tiled over destination rows
# ----------------------------------------------------------------------------
def _attn_kernel(adj_ref, hsrc_ref, el_ref, ert_ref, bias_ref, out_ref, acc_ref,
                 *, heads, fout, out_dim, concat, residual, act, res_col, tm,
                 elem_dtype):
    # adj_ref : (tm, N)   int8 — dst-row tile of the dense adjacency mask
    # hsrc_ref: (N, Daug) bf16 — fused projections for ALL sources (resident)
    # el_ref  : (tm, heads)    — a_l . H for this dst tile
    # ert_ref : (heads, N)     — a_r . H, pre-transposed once per layer
    # bias_ref: (heads, fout) f32
    cdt = elem_dtype
    # Hoisted out of the head loop: additive mask bias (one VALU add per
    # element per head instead of a select).
    mbias = jnp.where(adj_ref[...] > 0, 0.0, -1e30).astype(cdt)       # (tm, N)
    el = el_ref[...].astype(cdt)
    ert = ert_ref[...].astype(cdt)
    hsrc = hsrc_ref[...]
    bias = bias_ref[...]

    # TODO(synk): switch to lax.fori_loop(..., unroll=2) if sampled head counts
    # grow (>= 8) so the (tm, N) temporaries don't blow vreg pressure.
    for h in range(heads):
        e = el[:, h:h + 1] + ert[h:h + 1, :]                 # (tm, N)
        e = jnp.maximum(e, 0.2 * e)                          # LeakyReLU(0.2)
        e = e + mbias                                        # mask non-edges
        m = jnp.max(e, axis=-1, keepdims=True)
        p = jnp.exp(e - m)                                   # <= 1, no overflow
        denom = jnp.sum(p.astype(jnp.float32), -1, keepdims=True)   # f32 sum
        inv = pl.reciprocal(denom, approx=True)              # EUP, near-free
        alpha = (p * inv.astype(cdt)).astype(jnp.bfloat16)
        out_h = jnp.dot(alpha, hsrc[:, h * fout:(h + 1) * fout],
                        preferred_element_type=jnp.float32)
        out_h = out_h + bias[h:h + 1, :]
        if concat:                                           # slice-write
            acc_ref[:, h * fout:(h + 1) * fout] = out_h
        elif h == 0:
            acc_ref[...] = out_h
        else:
            acc_ref[...] += out_h

    res = acc_ref[...]
    if (not concat) and heads > 1:
        res = res * (1.0 / float(heads))
    if residual:
        # residual dst rows sliced from the already-resident H_aug (no extra DMA)
        row0 = pl.multiple_of(pl.program_id(0) * tm, tm)
        res = res + hsrc_ref[pl.ds(row0, tm),
                             pl.ds(res_col, out_dim)].astype(jnp.float32)
    if act == "elu":
        res = jnp.where(res > 0, res, jnp.exp(res) - 1.0)
    elif act == "linear":
        pass
    # TODO(synk): other GraphNAS activations (sigmoid/tanh/relu6/...) not wired
    # because the sampled `actions` below only use elu / linear.
    out_ref[...] = res.astype(out_ref.dtype)


# ----------------------------------------------------------------------------
# One NASLayer forward
# ----------------------------------------------------------------------------
def gat_layer(x, adj_i8, params, *, heads, fout, concat, residual, act,
              batch_normal, tm, gen, vmem_cap, buffered_ok, elem_dtype):
    n_pad, fin = x.shape
    out_dim = heads * fout if concat else fout

    # ---- fused augmented weight: [W_0..W_{H-1} | W_res | W@a_l | W@a_r] ----
    W, al, ar = params["w"], params["al"], params["ar"]
    w_heads = jnp.transpose(W, (1, 0, 2)).reshape(fin, heads * fout)
    w_el = jnp.einsum("hif,hf->ih", W, al)                   # (fin, heads)
    w_er = jnp.einsum("hif,hf->ih", W, ar)                   # (fin, heads)
    cols = [w_heads]
    if residual:
        cols.append(params["wres"])
    cols += [w_el, w_er]
    w_aug = jnp.concatenate(cols, axis=1).astype(jnp.bfloat16)
    d_aug = w_aug.shape[1]
    hf = heads * fout
    res_col = hf
    col_el = hf + (out_dim if residual else 0)
    col_er = col_el + heads

    # ---- kernel 1: projection with its own (larger) row tile ----
    proj_cap = 512 if vmem_cap >= (96 << 20) else 256
    tm_proj = tm
    while tm_proj * 2 <= min(proj_cap, n_pad) and n_pad % (tm_proj * 2) == 0:
        tm_proj *= 2

    proj_args = [x]
    proj_specs = [pl.BlockSpec((tm_proj, fin), lambda i: (i, 0))]
    if batch_normal:
        proj_args += [params["bn_g"], params["bn_b"]]
        proj_specs += [_const_spec((1, fin), buffered_ok),
                       _const_spec((1, fin), buffered_ok)]
    proj_args.append(w_aug)
    proj_specs.append(_const_spec((fin, d_aug), buffered_ok))

    nbuf = 1 if buffered_ok else 2
    fin_p, d_pad = _round_up(fin, 128), _round_up(d_aug, 128)
    proj_vmem = (2 * tm_proj * fin_p * 4 + nbuf * _round_up(fin, 16) * d_pad * 2
                 + 2 * tm_proj * d_pad * 2 + 4 * nbuf * fin_p * 4)
    h_aug = pl.pallas_call(
        functools.partial(_proj_kernel, batch_normal=batch_normal),
        out_shape=jax.ShapeDtypeStruct((n_pad, d_aug), jnp.bfloat16),
        grid=(n_pad // tm_proj,),
        in_specs=proj_specs,
        out_specs=pl.BlockSpec((tm_proj, d_aug), lambda i: (i, 0)),
        compiler_params=pltpu.CompilerParams(
            dimension_semantics=("parallel",),
            vmem_limit_bytes=_vmem_limit(proj_vmem, vmem_cap)),
    )(*proj_args)

    # el per dst node (tiled input) and er pre-transposed ONCE per layer (XLA),
    # so the attention kernel never transposes / relays out invariant data.
    el = jax.lax.slice_in_dim(h_aug, col_el, col_el + heads, axis=1)
    er_t = jnp.transpose(jax.lax.slice_in_dim(h_aug, col_er, col_er + heads, axis=1))

    # ---- kernel 2: attention + aggregation over destination-row tiles ----
    n_lane = _round_up(n_pad, 128)
    out_p = _round_up(out_dim, 128)
    attn_vmem = (2 * _round_up(tm, 32) * n_lane                   # adj slabs
                 + nbuf * _round_up(n_pad, 16) * d_pad * 2        # resident H_aug
                 + 2 * _round_up(tm, 16) * 128 * 2                # el tiles
                 + nbuf * _round_up(heads, 16) * n_lane * 2       # er^T
                 + nbuf * _round_up(heads, 8) * 128 * 4           # bias
                 + 3 * _round_up(tm, 8) * out_p * 4               # out + acc
                 + 6 * tm * n_lane * 4)                           # (tm,N) temps
    adj_kwargs = {}
    if buffered_ok and gen == 5:
        # v5e has the lowest HBM bandwidth: deeper-buffer the streamed adjacency.
        adj_kwargs["pipeline_mode"] = pl.Buffered(3)
    adj_spec = pl.BlockSpec((tm, n_pad), lambda i: (i, 0), **adj_kwargs)

    kernel = functools.partial(
        _attn_kernel, heads=heads, fout=fout, out_dim=out_dim, concat=concat,
        residual=residual, act=act, res_col=res_col, tm=tm,
        elem_dtype=elem_dtype)
    # TODO(synk): for graphs whose H_aug / adjacency slabs exceed VMEM (large N
    # on v7x), add a source-block grid axis with flash-style online softmax.
    return pl.pallas_call(
        kernel,
        out_shape=jax.ShapeDtypeStruct((n_pad, out_dim), jnp.float32),
        grid=(n_pad // tm,),
        in_specs=[
            adj_spec,                                         # (tm, N) int8
            _const_spec((n_pad, d_aug), buffered_ok),         # H_aug, all sources
            pl.BlockSpec((tm, heads), lambda i: (i, 0)),      # el, dst tile
            _const_spec((heads, n_pad), buffered_ok),         # er^T
            _const_spec((heads, fout), buffered_ok),          # bias
        ],
        out_specs=pl.BlockSpec((tm, out_dim), lambda i: (i, 0)),
        scratch_shapes=[pltpu.VMEM((tm, out_dim), jnp.float32)],
        compiler_params=pltpu.CompilerParams(
            dimension_semantics=("parallel",),
            vmem_limit_bytes=_vmem_limit(attn_vmem, vmem_cap)),
    )(adj_i8, h_aug, el, er_t, params["bias"])


# ----------------------------------------------------------------------------
# GraphNet: parameter construction + forward (loop over layers)
# ----------------------------------------------------------------------------
def parse_actions(actions, num_feat, num_label, state_num=5, residual=True):
    assert len(actions) % state_num == 0
    layer_nums = len(actions) // state_num
    layers = []
    in_ch = num_feat
    for i in range(layer_nums):
        act = actions[i * state_num + 2]
        heads = actions[i * state_num + 3]
        out_ch = actions[i * state_num + 4]
        concat = i != layer_nums - 1
        res = residual and (i != 0)
        layers.append(dict(fin=in_ch, heads=heads, fout=out_ch,
                           concat=concat, residual=res, act=act))
        in_ch = heads * out_ch
    assert layers[-1]["fout"] == num_label, "wrong structure"
    return layers


def init_params(key, layer_cfgs):
    params = []
    for cfg in layer_cfgs:
        key, k1, k2, k3, k4 = jax.random.split(key, 5)
        fin, heads, fout = cfg["fin"], cfg["heads"], cfg["fout"]
        out_dim = heads * fout if cfg["concat"] else fout
        p = {
            "w":    0.3 * jax.random.normal(k1, (heads, fin, fout), jnp.float32),
            "al":   0.3 * jax.random.normal(k2, (heads, fout), jnp.float32),
            "ar":   0.3 * jax.random.normal(k3, (heads, fout), jnp.float32),
            "bias": jnp.zeros((heads, fout), jnp.float32),
            "bn_g": jnp.ones((1, fin), jnp.float32),
            "bn_b": jnp.zeros((1, fin), jnp.float32),
            "wres": (0.3 * jax.random.normal(k4, (fin, out_dim), jnp.float32)
                     if cfg["residual"] else jnp.zeros((fin, out_dim), jnp.float32)),
        }
        params.append(p)
    return params


def graphnet_forward(feat, adj, layer_cfgs, params, batch_normal=True,
                     tile_m=None):
    gen, vmem_cap = _tpu_info()
    buffered_ok = _buffered_supported()
    # bf16 VPU/EUP element path on v6e/v7x; f32 on v5e / unknown chips.
    elem_dtype = jnp.bfloat16 if gen >= 6 else jnp.float32

    n = feat.shape[0]
    tm = _pick_tile(n, vmem_cap) if tile_m is None else tile_m
    n_pad = _round_up(n, tm)
    valid = None
    if n_pad != n:
        feat = jnp.pad(feat, ((0, n_pad - n), (0, 0)))
        adj = jnp.pad(adj, ((0, n_pad - n), (0, n_pad - n)))
        valid = (jnp.arange(n_pad) < n)[:, None]

    adj_i8 = (adj > 0).astype(jnp.int8)   # int8 mask: 4x less HBM per layer
    # TODO(synk): bit-pack adjacency to 1 bit/edge for very large N on v5e.

    out = feat
    for cfg, p in zip(layer_cfgs, params):
        out = gat_layer(out, adj_i8, p,
                        heads=cfg["heads"], fout=cfg["fout"],
                        concat=cfg["concat"], residual=cfg["residual"],
                        act=cfg["act"], batch_normal=batch_normal,
                        tm=tm, gen=gen, vmem_cap=vmem_cap,
                        buffered_ok=buffered_ok, elem_dtype=elem_dtype)
        if valid is not None:
            out = jnp.where(valid, out, 0.0)   # keep padded rows benign
    return out[:n] if valid is not None else out


# ----------------------------------------------------------------------------
# Pure-JAX f32 reference (for correctness check)
# ----------------------------------------------------------------------------
def reference_forward(feat, adj, layer_cfgs, params, batch_normal=True):
    out = feat
    for cfg, p in zip(layer_cfgs, params):
        x = out
        if batch_normal:
            x = x * (p["bn_g"] / jnp.sqrt(1.0 + 1e-5)) + p["bn_b"]
        heads = []
        for h in range(cfg["heads"]):
            H = x @ p["w"][h]
            el = jnp.sum(H * p["al"][h][None, :], -1, keepdims=True)
            er = jnp.sum(H * p["ar"][h][None, :], -1, keepdims=True)
            e = el + er.T
            e = jnp.where(e > 0, e, 0.2 * e)
            e = jnp.where(adj > 0, e, -1e30)
            a = jax.nn.softmax(e, axis=-1)
            heads.append(a @ H + p["bias"][h][None, :])
        if cfg["concat"]:
            o = jnp.concatenate(heads, -1)
        else:
            o = sum(heads) / float(cfg["heads"])
        if cfg["residual"]:
            o = o + x @ p["wres"]
        if cfg["act"] == "elu":
            o = jax.nn.elu(o)
        out = o
    return out


# ----------------------------------------------------------------------------
if __name__ == "__main__":
    key = jax.random.PRNGKey(0)

    # small problem: 64 nodes, 8 input features, 4 labels
    N, NUM_FEAT, NUM_LABEL = 64, 8, 4

    # GraphNAS action string, state_num = 5:
    # [attention, aggregator, act, head_num, out_channels] per layer
    actions = ["gat", "sum", "elu", 2, 8,
               "gat", "sum", "linear", 1, NUM_LABEL]
    layer_cfgs = parse_actions(actions, NUM_FEAT, NUM_LABEL, state_num=5)

    key, kf = jax.random.split(key)
    feat = jax.random.normal(kf, (N, NUM_FEAT), jnp.float32)

    # deterministic ring graph with self-loops (dense adjacency mask)
    idx = jnp.arange(N)
    adj = jnp.zeros((N, N), jnp.float32)
    adj = adj.at[idx, idx].set(1.0)
    adj = adj.at[idx, (idx + 1) % N].set(1.0)
    adj = adj.at[idx, (idx - 1) % N].set(1.0)

    params = init_params(key, layer_cfgs)

    # auto tile: 32 dst rows -> 2-step "parallel" grid per layer (exercises the
    # pipeline and lets a v7x megacore shard the dst tiles across its 2 cores).
    out = graphnet_forward(feat, adj, layer_cfgs, params)
    out = jax.block_until_ready(out)

    ref = reference_forward(feat, adj, layer_cfgs, params)
    assert out.shape == (N, NUM_LABEL), out.shape
    # tolerance accounts for bf16 matmul operands / bf16 H_aug storage,
    # the bf16 softmax element path (v6e/v7x) and the approx EUP reciprocal
    err = float(jnp.max(jnp.abs(out - ref)))
    assert jnp.allclose(out, ref, atol=5e-2, rtol=5e-2), f"max err {err}"

    print("KERNEL_OK")
</pallas_src>

<mosaic_0001>
module attributes {stable_mosaic.version = 11 : i64} {
  func.func @_copy(%arg0: i32, %arg1: memref<8x128xf32, #tpu.memory_space<vmem>>, %arg2: memref<8x128xf32, #tpu.memory_space<vmem>>) attributes {dimension_semantics = [#tpu.dimension_semantics<arbitrary>], iteration_bounds = array<i64: 2>, scalar_prefetch = 0 : i64, scratch_operands = 0 : i64, tpu.core_type = #tpu.core_type<tc>, window_params = [{pipeline_mode = #tpu.pipeline_mode<synchronous>, transform_indices = @transform_0, window_bounds = array<i64: 8, 128>}, {pipeline_mode = #tpu.pipeline_mode<synchronous>, transform_indices = @transform_1, window_bounds = array<i64: 8, 128>}]} {
    %c0 = arith.constant 0 : index
    %c0_0 = arith.constant 0 : index
    %0 = vector.load %arg1[%c0, %c0_0] : memref<8x128xf32, #tpu.memory_space<vmem>>, vector<8x128xf32>
    %c0_1 = arith.constant 0 : index
    %c0_2 = arith.constant 0 : index
    %1 = vector.load %arg2[%c0_1, %c0_2] : memref<8x128xf32, #tpu.memory_space<vmem>>, vector<8x128xf32>
    tpu.vector_store %arg2[%c0_1, %c0_2], %0 {strides = array<i32>} : memref<8x128xf32, #tpu.memory_space<vmem>>, vector<8x128xf32>,
    return
  }
  func.func @transform_0(%arg0: i32) -> (i32, i32) {
    %c0_i32 = arith.constant 0 : i32
    %c0_i32_0 = arith.constant 0 : i32
    %c0_i32_1 = arith.constant 0 : i32
    return %c0_i32, %c0_i32_0 : i32, i32
  }
  func.func @transform_1(%arg0: i32) -> (i32, i32) {
    %c0_i32 = arith.constant 0 : i32
    %c0_i32_0 = arith.constant 0 : i32
    %c0_i32_1 = arith.constant 0 : i32
    return %c0_i32, %c0_i32_0 : i32, i32
  }
}

module attributes {stable_mosaic.version = 11 : i64} {
  func.func @_proj_kernel(%arg0: i32, %arg1: memref<64x8xf32, #tpu.memory_space<vmem>>, %arg2: memref<1x8xf32, #tpu.memory_space<vmem>>, %arg3: memref<1x8xf32, #tpu.memory_space<vmem>>, %arg4: memref<8x20xbf16, #tpu.memory_space<vmem>>, %arg5: memref<64x20xbf16, #tpu.memory_space<vmem>>) attributes {dimension_semantics = [#tpu.dimension_semantics<parallel>], iteration_bounds = array<i64: 1>, scalar_prefetch = 0 : i64, scratch_operands = 0 : i64, tpu.core_type = #tpu.core_type<tc>, window_params = [{transform_indices = @transform_0, window_bounds = array<i64: 64, 8>}, {pipeline_mode = #tpu.pipeline_mode<synchronous>, transform_indices = @transform_1, window_bounds = array<i64: 1, 8>}, {pipeline_mode = #tpu.pipeline_mode<synchronous>, transform_indices = @transform_2, window_bounds = array<i64: 1, 8>}, {pipeline_mode = #tpu.pipeline_mode<synchronous>, transform_indices = @transform_3, window_bounds = array<i64: 8, 20>}, {transform_indices = @transform_4, window_bounds = array<i64: 64, 20>}]} {
    %c0 = arith.constant 0 : index
    %c0_0 = arith.constant 0 : index
    %0 = vector.load %arg1[%c0, %c0_0] : memref<64x8xf32, #tpu.memory_space<vmem>>, vector<64x8xf32>
    %c0_1 = arith.constant 0 : index
    %c0_2 = arith.constant 0 : index
    %1 = vector.load %arg2[%c0_1, %c0_2] : memref<1x8xf32, #tpu.memory_space<vmem>>, vector<1x8xf32>
    %cst = arith.constant 0.999994993 : f32
    %2 = vector.broadcast %cst : f32 to vector<1x8xf32>
    %3 = arith.mulf %1, %2 : vector<1x8xf32>
    %4 = vector.broadcast %3 : vector<1x8xf32> to vector<64x8xf32>
    %5 = arith.mulf %0, %4 : vector<64x8xf32>
    %c0_3 = arith.constant 0 : index
    %c0_4 = arith.constant 0 : index
    %6 = vector.load %arg3[%c0_3, %c0_4] : memref<1x8xf32, #tpu.memory_space<vmem>>, vector<1x8xf32>
    %7 = vector.broadcast %6 : vector<1x8xf32> to vector<64x8xf32>
    %8 = arith.addf %5, %7 : vector<64x8xf32>
    %9 = arith.truncf %8 : vector<64x8xf32> to vector<64x8xbf16>
    %c0_5 = arith.constant 0 : index
    %c0_6 = arith.constant 0 : index
    %10 = vector.load %arg4[%c0_5, %c0_6] : memref<8x20xbf16, #tpu.memory_space<vmem>>, vector<8x20xbf16>
    %cst_7 = arith.constant dense<0.000000e+00> : vector<64x20xf32>
    %11 = tpu.matmul %9, %10, %cst_7 {dimension_numbers = #tpu.dot_dimension_numbers<[1], [0], [0], [1], [0, 0, 1, 1], [], []>} : vector<64x8xbf16>, vector<8x20xbf16>, vector<64x20xf32> -> vector<64x20xf32>
    %12 = arith.truncf %11 : vector<64x20xf32> to vector<64x20xbf16>
    %c0_8 = arith.constant 0 : index
    %c0_9 = arith.constant 0 : index
    %13 = vector.load %arg5[%c0_8, %c0_9] : memref<64x20xbf16, #tpu.memory_space<vmem>>, vector<64x20xbf16>
    tpu.vector_store %arg5[%c0_8, %c0_9], %12 {strides = array<i32>} : memref<64x20xbf16, #tpu.memory_space<vmem>>, vector<64x20xbf16>,
    return
  }
  func.func @transform_0(%arg0: i32) -> (i32, i32) {
    %c0_i32 = arith.constant 0 : i32
    %c0_i32_0 = arith.constant 0 : i32
    return %arg0, %c0_i32 : i32, i32
  }
  func.func @transform_1(%arg0: i32) -> (i32, i32) {
    %c0_i32 = arith.constant 0 : i32
    %c0_i32_0 = arith.constant 0 : i32
    %c0_i32_1 = arith.constant 0 : i32
    return %c0_i32, %c0_i32_0 : i32, i32
  }
  func.func @transform_2(%arg0: i32) -> (i32, i32) {
    %c0_i32 = arith.constant 0 : i32
    %c0_i32_0 = arith.constant 0 : i32
    %c0_i32_1 = arith.constant 0 : i32
    return %c0_i32, %c0_i32_0 : i32, i32
  }
  func.func @transform_3(%arg0: i32) -> (i32, i32) {
    %c0_i32 = arith.constant 0 : i32
    %c0_i32_0 = arith.constant 0 : i32
    %c0_i32_1 = arith.constant 0 : i32
    return %c0_i32, %c0_i32_0 : i32, i32
  }
  func.func @transform_4(%arg0: i32) -> (i32, i32) {
    %c0_i32 = arith.constant 0 : i32
    %c0_i32_0 = arith.constant 0 : i32
    return %arg0, %c0_i32 : i32, i32
  }
}

</mosaic_0001>

<llo_original>
// kernel: tpu_custom_call.1
$region0: #{tpu_custom_call.1}
  #allocation0 [shape = 'u32[]', space=smem, size = 0x4, offset = 0x4, fixed_abs, tag = 'smem constant byte address 0x4 - core index']
  #allocation1 [shape = 'u32[144,128]{1,0:T(1,128)}', space=vmem, size = 0x12000, scoped, tag = 'internal scratch']
  %s0 = inlined_call_operand.hbm [shape: f32[8,128], index: 0, kind: input, shape index: {}]
  %s1 = inlined_call_operand.hbm [shape: f32[8,128], index: 1, kind: output, shape index: {}]
  %s2 = sld [smem:[#allocation0]]
  $region41: #{tpu_custom_call.1} parent=0
    _
  %s4 = ssub.s32 1, %s2
  %s5 = scalar_select 0, %s4, %s2
  $region1: #{tpu_custom_call.1} parent=0
    #allocation2 [shape = 'u8[4096]{0}', space=vmem, size = 0x1000, scoped, tag = 'input window, operand 0, single buffered']
    #allocation3 [shape = 's32[2]{0}', space=sflag, size = 0x8, scoped, tag = 'scoped memory for tpu_custom_call.1']
    #allocation4 [shape = 's32[2]{0}', space=sflag, size = 0x8, scoped, tag = 'scoped memory for tpu_custom_call.1']
    #allocation5 [shape = 'u8[4096]{0}', space=vmem, size = 0x1000, scoped, tag = 'output window, operand 0, single buffered']
    %6 = vsyncpa [#allocation3], 0
    %7 = vsyncpa [#allocation4], 0
    loop: start=0, step=1, limit=4
    $region2: #{tpu_custom_call.1} parent=1 // loop_pre_header
      _
    $region3: #{tpu_custom_call.1} parent=1 // loop_header
      %s9 = sphi 0, %s13
      %p10 = scmp.ge.s32.totalorder %s9, 4
      %s17 = sphi 0, %s17
      %s19 = sphi 0, %s17
      %s20 = sphi 0, %s19
      %s34 = sphi 0, %s20
      %s38 = sphi 0, %s38
      %s40 = sphi 0, %s38
      %s41 = sphi 0, %s40
      %s55 = sphi 0, %s41
    $region4: #{tpu_custom_call.1} parent=1 // loop_header_branch
      %12 = sbr.rel (%p10) target = $region8
    $region5: #{tpu_custom_call.1} parent=1 // loop_body
      %s14 = ssub.s32 %s9, 1
      %s15 = ssub.s32 %s9, 2
      %s16 = sadd.s32 %s9, 1
      %s18 = sadd.s32 %s17, 1
      %p21 = scmp.eq.s32.totalorder %s9, 1
      %p22 = scmp.ne.s32.totalorder %s17, %s19
      %p23 = scmp.eq.s32.totalorder %s9, 0
      %p24 = por %p22, %p23
      %p25 = scmp.ne.s32.totalorder %s17, %s19
      %p26 = scmp.eq.s32.totalorder %s14, 1
      %p27 = por %p25, %p26
      %p28 = scmp.ne.s32.totalorder %s19, %s20
      %p29 = scmp.eq.s32.totalorder %s14, 0
      %p30 = por %p28, %p29
      %p31 = scmp.ne.s32.totalorder %s19, %s20
      %p32 = scmp.eq.s32.totalorder %s15, 1
      %p33 = por %p31, %p32
      %p35 = scmp.ne.s32.totalorder %s20, %s34
      %p36 = scmp.eq.s32.totalorder %s15, 0
      %p37 = por %p35, %p36
      %s39 = sadd.s32 %s38, 1
      %p42 = scmp.eq.s32.totalorder %s9, 1
      %p43 = scmp.ne.s32.totalorder %s38, %s40
      %p44 = scmp.eq.s32.totalorder %s9, 0
      %p45 = por %p43, %p44
      %p46 = scmp.ne.s32.totalorder %s38, %s40
      %p47 = scmp.eq.s32.totalorder %s14, 1
      %p48 = por %p46, %p47
      %p49 = scmp.ne.s32.totalorder %s40, %s41
      %p50 = scmp.eq.s32.totalorder %s14, 0
      %p51 = por %p49, %p50
      %p52 = scmp.ne.s32.totalorder %s40, %s41
      %p53 = scmp.eq.s32.totalorder %s15, 1
      %p54 = por %p52, %p53
      %p56 = scmp.ne.s32.totalorder %s41, %s55
      %p57 = scmp.eq.s32.totalorder %s15, 0
      %p58 = por %p56, %p57
      %p59 = scmp.le.s32.totalorder 1, %s9
      %p60 = scmp.lt.s32.totalorder %s9, 3
      %p61 = pnand %p59, %p60
      %p62 = pneg %p61
      // Predicated region
      $region9: #{tpu_custom_call.1} parent=5 // pred_check
        _
      $region10: #{tpu_custom_call.1} parent=5 // pred_check_branch
        %64 = sbr.rel (%p61) target = $region12
      $region11: #{tpu_custom_call.1} parent=5 // pred_region
        %s65 = ssub.s32 %s9, 1
        // Predicated region
        $region13: #{tpu_custom_call.1} parent=11 // pred_check
          %p66 = pneg %p30
        $region14: #{tpu_custom_call.1} parent=11 // pred_check_branch
          %68 = sbr.rel (%p66) target = $region16
        $region15: #{tpu_custom_call.1} parent=11 // pred_region
          %s70 = ssub.s32 128, 128
          %71 = vsyncadd [#allocation3], %s70
          %s73 = sshll.u32 [#allocation2], 4
          %s74 = int_to_ptr.vmem [resolvable:$true] %s73
          %76 = dma.hbm_to_vmem [thread:$0]  %s0, 128, %s74, [#allocation3]
        $region16: #{tpu_custom_call.1} parent=11 // pred_fallthru
          _
      $region12: #{tpu_custom_call.1} parent=5 // pred_fallthru
        _
      %p77 = scmp.lt.s32.totalorder %s9, 2
      // Predicated region
      $region17: #{tpu_custom_call.1} parent=5 // pred_check
        %p78 = pneg %p77
      $region18: #{tpu_custom_call.1} parent=5 // pred_check_branch
        %80 = sbr.rel (%p78) target = $region20
      $region19: #{tpu_custom_call.1} parent=5 // pred_region
        _
      $region20: #{tpu_custom_call.1} parent=5 // pred_fallthru
        _
      %p81 = scmp.le.s32.totalorder 1, %s9
      %p82 = scmp.lt.s32.totalorder %s9, 3
      %p83 = pnand %p81, %p82
      %p84 = pneg %p83
      // Predicated region
      $region21: #{tpu_custom_call.1} parent=5 // pred_check
        _
      $region22: #{tpu_custom_call.1} parent=5 // pred_check_branch
        %86 = sbr.rel (%p83) target = $region24
      $region23: #{tpu_custom_call.1} parent=5 // pred_region
        %s87 = ssub.s32 %s9, 1
        // Predicated region
        $region25: #{tpu_custom_call.1} parent=23 // pred_check
          %p88 = pneg %p30
        $region26: #{tpu_custom_call.1} parent=23 // pred_check_branch
          %90 = sbr.rel (%p88) target = $region28
        $region27: #{tpu_custom_call.1} parent=23 // pred_region
          %91 = dma.done [#allocation3], 128
        $region28: #{tpu_custom_call.1} parent=23 // pred_fallthru
          _
        %p92 = pneg %p30
        %p93 = pneg %p27
        %p94 = pneg %p51
        %p95 = pneg %p48
        %v96 = vld [vmem:[#allocation2] sm:$0xff]
        %97 = vst [vmem:[#allocation5] sm:$0xff] %v96
        // Predicated region
        $region29: #{tpu_custom_call.1} parent=23 // pred_check
          %p98 = pneg %p48
        $region30: #{tpu_custom_call.1} parent=23 // pred_check_branch
          %100 = sbr.rel (%p98) target = $region32
        $region31: #{tpu_custom_call.1} parent=23 // pred_region
          %s102 = ssub.s32 128, 128
          %103 = vsyncadd [#allocation4], %s102
          %s105 = sshll.u32 [#allocation5], 4
          %s106 = int_to_ptr.vmem [resolvable:$true] %s105
          %108 = dma.vmem_to_hbm [thread:$0]  %s106, 128, %s1, [#allocation4]
        $region32: #{tpu_custom_call.1} parent=23 // pred_fallthru
          _
        // Predicated region
        $region33: #{tpu_custom_call.1} parent=23 // pred_check
          %p109 = pneg %p48
        $region34: #{tpu_custom_call.1} parent=23 // pred_check_branch
          %111 = sbr.rel (%p109) target = $region36
        $region35: #{tpu_custom_call.1} parent=23 // pred_region
          %112 = dma.done [#allocation4], 128
        $region36: #{tpu_custom_call.1} parent=23 // pred_fallthru
          _
      $region24: #{tpu_custom_call.1} parent=5 // pred_fallthru
        _
      %p113 = scmp.le.s32.totalorder 2, %s9
      // Predicated region
      $region37: #{tpu_custom_call.1} parent=5 // pred_check
        %p114 = pneg %p113
      $region38: #{tpu_custom_call.1} parent=5 // pred_check_branch
        %116 = sbr.rel (%p114) target = $region40
      $region39: #{tpu_custom_call.1} parent=5 // pred_region
        %s117 = ssub.s32 %s9, 2
      $region40: #{tpu_custom_call.1} parent=5 // pred_fallthru
        _
    $region6: #{tpu_custom_call.1} parent=1 // loop_footer
      %s13 = sadd.s32 1, %s9
    $region7: #{tpu_custom_call.1} parent=1 // loop_footer_branch
      %8 = sbr.rel target = $region3
    $region8: #{tpu_custom_call.1} parent=1 // loop_exit
      _
    %118 = vsyncpa [#allocation3], 1
    %s119 = scalar_lea.sflag [#allocation3], 1
    %120 = vsyncpa %s119, 1
    %121 = vsyncpa [#allocation4], 1
    %s122 = scalar_lea.sflag [#allocation4], 1
    %123 = vsyncpa %s122, 1

// kernel: tpu_custom_call.1
$region0: #{tpu_custom_call.1}
  #allocation0 [shape = 'u32[]', space=smem, size = 0x4, offset = 0x4, fixed_abs, tag = 'smem constant byte address 0x4 - core index']
  #allocation1 [shape = 'u32[144,128]{1,0:T(1,128)}', space=vmem, size = 0x12000, scoped, tag = 'internal scratch']
  %s0 = inlined_call_operand.vmem [shape: f32[64,8], index: 0, kind: input, shape index: {}]
  %s1 = inlined_call_operand.vmem [shape: f32[1,8], index: 1, kind: input, shape index: {}]
  %s2 = inlined_call_operand.vmem [shape: f32[1,8], index: 2, kind: input, shape index: {}]
  %s3 = inlined_call_operand.vmem [shape: bf16[8,20], index: 3, kind: input, shape index: {}]
  %s4 = inlined_call_operand.vmem [shape: bf16[64,20], index: 4, kind: output, shape index: {}]
  %s5 = sld [smem:[#allocation0]]
  $region26: #{tpu_custom_call.1} parent=0
    _
  %s7 = ssub.s32 1, %s5
  %s8 = scalar_select 0, %s7, %s5
  // Predicated region
  $region2: #{tpu_custom_call.1} parent=0 // pred_check
    _
  $region3: #{tpu_custom_call.1} parent=0 // pred_check_branch
    %10 = sbr.rel (0) target = $region5
  $region4: #{tpu_custom_call.1} parent=0 // pred_region
    _
  $region5: #{tpu_custom_call.1} parent=0 // pred_fallthru
    _
  // Predicated region
  $region6: #{tpu_custom_call.1} parent=0 // pred_check
    _
  $region7: #{tpu_custom_call.1} parent=0 // pred_check_branch
    %12 = sbr.rel (0) target = $region9
  $region8: #{tpu_custom_call.1} parent=0 // pred_region
    _
  $region9: #{tpu_custom_call.1} parent=0 // pred_fallthru
    _
  // Predicated region
  $region10: #{tpu_custom_call.1} parent=0 // pred_check
    _
  $region11: #{tpu_custom_call.1} parent=0 // pred_check_branch
    %14 = sbr.rel (0) target = $region13
  $region12: #{tpu_custom_call.1} parent=0 // pred_region
    _
  $region13: #{tpu_custom_call.1} parent=0 // pred_fallthru
    _
  // Predicated region
  $region14: #{tpu_custom_call.1} parent=0 // pred_check
    _
  $region15: #{tpu_custom_call.1} parent=0 // pred_check_branch
    %16 = sbr.rel (0) target = $region17
  $region16: #{tpu_custom_call.1} parent=0 // pred_region
    _
  $region17: #{tpu_custom_call.1} parent=0 // pred_fallthru
    _
  %v18 = vld [vmem:[%s0] sm:$0xff]
  %v19 = vld [vmem:[%s0 + $0x8] sm:$0xff]
  %v20 = vld [vmem:[%s0 + $0x10] sm:$0xff]
  %v21 = vld [vmem:[%s0 + $0x18] sm:$0xff]
  %v22 = vld [vmem:[%s0 + $0x20] sm:$0xff]
  %v23 = vld [vmem:[%s0 + $0x28] sm:$0xff]
  %v24 = vld [vmem:[%s0 + $0x30] sm:$0xff]
  %v25 = vld [vmem:[%s0 + $0x38] sm:$0xff]
  %v26 = vld [vmem:[%s1] sm:$0x1]
  %v27 = vmul.f32 %v26, 0.999995
  %v29 = vlaneseq
  %v30 = vshrl.u32 %v29, 7
  %v31 = vsub.s32 0, %v30
  %v32 = vrot.slane %v27, %v31
  %v34 = vmul.f32 %v18, %v32
  %v35 = vmul.f32 %v19, %v32
  %v36 = vmul.f32 %v20, %v32
  %v37 = vmul.f32 %v21, %v32
  %v38 = vmul.f32 %v22, %v32
  %v39 = vmul.f32 %v23, %v32
  %v40 = vmul.f32 %v24, %v32
  %v41 = vmul.f32 %v25, %v32
  %v42 = vld [vmem:[%s2] sm:$0x1]
  %v44 = vlaneseq
  %v45 = vshrl.u32 %v44, 7
  %v46 = vsub.s32 0, %v45
  %v47 = vrot.slane %v42, %v46
  %v49 = vadd.f32 %v34, %v47
  %v50 = vadd.f32 %v35, %v47
  %v51 = vadd.f32 %v36, %v47
  %v52 = vadd.f32 %v37, %v47
  %v53 = vadd.f32 %v38, %v47
  %v54 = vadd.f32 %v39, %v47
  %v55 = vadd.f32 %v40, %v47
  %v56 = vadd.f32 %v41, %v47
  %v57 = vpack.c.bf16 %v50, %v49
  %v58 = vpack.c.bf16 %v52, %v51
  %v59 = vpack.c.bf16 %v54, %v53
  %v60 = vpack.c.bf16 %v56, %v55
  %v61 = vld [vmem:[%s3] sm:$0xf]
  %vm62 = vcmask 64512
  %v64 = vsel %vm62, %v57, 0
  %v67 = vsel %vm62, %v58, 0
  %v70 = vsel %vm62, %v59, 0
  %v73 = vsel %vm62, %v60, 0
  %vm75 = vcmask 1043456
  %v77 = vsel %vm75, %v61, 0
  %79 = vmatprep.subr.bf16.mxu0 0
  %80 = vmatpush1.bf16.msra.mxu0 %v77
  %81 = vmatprep.subr.bf16.mxu0 0
  %82 = vmatpush1.bf16.msra.mxu0 0
  %83 = vmatprep.subr.bf16.mxu0 0
  %84 = vmatpush1.bf16.msra.mxu0 0
  %85 = vmatprep.subr.bf16.mxu0 0
  %86 = vmatpush1.bf16.msra.mxu0 0
  %87 = vmatprep.subr.bf16.mxu0 0
  %88 = vmatpush1.bf16.msra.mxu0 0
  %89 = vmatprep.subr.bf16.mxu0 0
  %90 = vmatpush1.bf16.msra.mxu0 0
  %91 = vmatprep.subr.bf16.mxu0 0
  %92 = vmatpush1.bf16.msra.mxu0 0
  %93 = vmatprep.subr.bf16.mxu0 0
  %94 = vmatpush1.bf16.msra.mxu0 0
  %95 = vmatprep.subr.bf16.mxu0 0
  %96 = vmatpush1.bf16.msra.mxu0 0
  %97 = vmatprep.subr.bf16.mxu0 0
  %98 = vmatpush1.bf16.msra.mxu0 0
  %99 = vmatprep.subr.bf16.mxu0 0
  %100 = vmatpush1.bf16.msra.mxu0 0
  %101 = vmatprep.subr.bf16.mxu0 0
  %102 = vmatpush1.bf16.msra.mxu0 0
  %103 = vmatprep.subr.bf16.mxu0 0
  %104 = vmatpush1.bf16.msra.mxu0 0
  %105 = vmatprep.subr.bf16.mxu0 0
  %106 = vmatpush1.bf16.msra.mxu0 0
  %107 = vmatprep.subr.bf16.mxu0 0
  %108 = vmatpush1.bf16.msra.mxu0 0
  %109 = vmatprep.subr.bf16.mxu0 0
  %110 = vmatpush1.bf16.msra.mxu0 0
  %111 = vmatprep.mubr.bf16.mxu0 0
  %112 = vmatmul.mubr.bf16.gmra.mrb[0].mxu0 %v64
  %v113 = vpop.f32.mrb[0].mxu0
  %v114 = vadd.f32 0.0, %v113
  %v115 = vpop.f32.mrb[0].mxu0
  %v116 = vpop.f32.mrb[0].mxu0
  %v117 = vadd.f32 0.0, %v116
  %v118 = vpop.f32.mrb[0].mxu0
  %119 = vmatprep.mubr.bf16.mxu0 0
  %120 = vmatmul.mubr.bf16.gmra.mrb[0].mxu0 %v67
  %v121 = vpop.f32.mrb[0].mxu0
  %v122 = vadd.f32 0.0, %v121
  %v123 = vpop.f32.mrb[0].mxu0
  %v124 = vpop.f32.mrb[0].mxu0
  %v125 = vadd.f32 0.0, %v124
  %v126 = vpop.f32.mrb[0].mxu0
  %127 = vmatprep.mubr.bf16.mxu0 0
  %128 = vmatmul.mubr.bf16.gmra.mrb[0].mxu0 %v70
  %v129 = vpop.f32.mrb[0].mxu0
  %v130 = vadd.f32 0.0, %v129
  %v131 = vpop.f32.mrb[0].mxu0
  %v132 = vpop.f32.mrb[0].mxu0
  %v133 = vadd.f32 0.0, %v132
  %v134 = vpop.f32.mrb[0].mxu0
  %135 = vmatprep.mubr.bf16.mxu0 0
  %136 = vmatmul.mubr.bf16.gmra.mrb[0].mxu0 %v73
  %v137 = vpop.f32.mrb[0].mxu0
  %v138 = vadd.f32 0.0, %v137
  %v139 = vpop.f32.mrb[0].mxu0
  %v140 = vpop.f32.mrb[0].mxu0
  %v141 = vadd.f32 0.0, %v140
  %v142 = vpop.f32.mrb[0].mxu0
  %143 = vdwg.mxu0
  %v144 = vpack.c.bf16 %v117, %v114
  %v145 = vpack.c.bf16 %v125, %v122
  %v146 = vpack.c.bf16 %v133, %v130
  %v147 = vpack.c.bf16 %v141, %v138
  %v152 = vunpack.c.l.b16 %v144
  %v153 = vunpack.c.h.b16 %v144
  %v154 = vunpack.c.l.b16 %v145
  %v155 = vunpack.c.h.b16 %v145
  %v156 = vunpack.c.l.b16 %v146
  %v157 = vunpack.c.h.b16 %v146
  %v158 = vunpack.c.l.b16 %v147
  %v159 = vunpack.c.h.b16 %v147
  %v160 = vpack.c.b16 %v152, %v152
  %v161 = vpack.c.b16 %v153, %v153
  %v162 = vpack.c.b16 %v154, %v154
  %v163 = vpack.c.b16 %v155, %v155
  %v164 = vpack.c.b16 %v156, %v156
  %v165 = vpack.c.b16 %v157, %v157
  %v166 = vpack.c.b16 %v158, %v158
  %v167 = vpack.c.b16 %v159, %v159
  %vm176 = vcmask 158720
  %177 = vst.msk [vmem:[%s4] sm:$0xf] %vm176, %v160
  %178 = vst.msk [vmem:[%s4 + $0x4] sm:$0xf] %vm176, %v161
  %179 = vst.msk [vmem:[%s4 + $0x8] sm:$0xf] %vm176, %v162
  %180 = vst.msk [vmem:[%s4 + $0xc] sm:$0xf] %vm176, %v163
  %181 = vst.msk [vmem:[%s4 + $0x10] sm:$0xf] %vm176, %v164
  %182 = vst.msk [vmem:[%s4 + $0x14] sm:$0xf] %vm176, %v165
  %183 = vst.msk [vmem:[%s4 + $0x18] sm:$0xf] %vm176, %v166
  %184 = vst.msk [vmem:[%s4 + $0x1c] sm:$0xf] %vm176, %v167
  // Predicated region
  $region18: #{tpu_custom_call.1} parent=0 // pred_check
    _
  $region19: #{tpu_custom_call.1} parent=0 // pred_check_branch
    %186 = sbr.rel (0) target = $region21
  $region20: #{tpu_custom_call.1} parent=0 // pred_region
    _
  $region21: #{tpu_custom_call.1} parent=0 // pred_fallthru
    _
  // Predicated region
  $region22: #{tpu_custom_call.1} parent=0 // pred_check
    _
  $region23: #{tpu_custom_call.1} parent=0 // pred_check_branch
    %188 = sbr.rel (0) target = $region25
  $region24: #{tpu_custom_call.1} parent=0 // pred_region
    _
  $region25: #{tpu_custom_call.1} parent=0 // pred_fallthru
    _

</llo_original>
